<compile_context>
chip_gen: v6e
topology: v6e:2x2x1
jax: 0.10.0
libtpu: 0.0.40
codegen_flags: <defaults>
</compile_context>

<pallas_src>
import numpy as np
import jax
import jax.numpy as jnp
from jax.experimental import pallas as pl
from jax.experimental.pallas import tpu as pltpu


def _round_up(x, m):
    return (x + m - 1) // m * m


def _cdiv(a, b):
    return -(-a // b)


# ----------------------------------------------------------------------------- kernel
def _cbp_spectrum_kernel(x1_ref, x2_ref, p1_ref, p2_ref, out_ref):
    """Accumulate the product spectrum of the two count sketches, summed over the
    spatial rows of this tile, into the per-(batch, K-block) resident output.

    x*_ref  : [1, T, Cp]       activation tile (bf16 or f32)
    p*_ref  : [Cp, 2*TK]       folded sketch@rDFT basis for this K-block: [cos | sin]
    out_ref : [1, 1, 2*TK]     resident accumulator: [sum Re(F1*F2) | sum -Im(F1*F2)]
    """
    t = pl.program_id(2)
    tk = out_ref.shape[-1] // 2

    x1 = x1_ref[0]                                     # [T, Cp1]
    x2 = x2_ref[0]                                     # [T, Cp2]

    # Folded count-sketch + forward rDFT: one MXU matmul per input, f32 accum.
    # F = a - i*b for a real signal (a = x@cos-basis, b = x@sin-basis).
    f1 = jnp.dot(x1, p1_ref[...], preferred_element_type=jnp.float32)   # [T, 2*TK]
    f2 = jnp.dot(x2, p2_ref[...], preferred_element_type=jnp.float32)

    a1, b1 = f1[:, :tk], f1[:, tk:]
    a2, b2 = f2[:, :tk], f2[:, tk:]

    # F1*F2 = (a1*a2 - b1*b2) - i*(a1*b2 + a2*b1)
    pr = a1 * a2 - b1 * b2                             # Re(F1*F2)    [T, TK]
    q = a1 * b2 + b1 * a2                              # -Im(F1*F2)   [T, TK]

    contrib = jnp.concatenate(
        [jnp.sum(pr, axis=0, keepdims=True),
         jnp.sum(q, axis=0, keepdims=True)], axis=-1)[None]            # [1, 1, 2*TK]

    @pl.when(t == 0)
    def _():
        out_ref[...] = jnp.zeros_like(out_ref)

    out_ref[...] += contrib


# -------------------------------------------------------------------- constant folding
def make_folded_projection(rand_h, rand_s, output_dim, c_pad, k_pad, tk, dtype):
    """Folded (dense count-sketch) @ (rDFT basis), restricted to the K = D//2+1
    non-redundant frequencies, zero-padded to [c_pad, k_pad] and laid out per
    K-block of width `tk` as [cos_block | sin_block], giving [c_pad, 2*k_pad].
    Phases use integer (h*k) mod D so they stay exact for large output_dim."""
    D = output_dim
    K = D // 2 + 1
    h = np.asarray(rand_h, dtype=np.int64)
    s = np.asarray(rand_s, dtype=np.float64)
    hk = (h[:, None] * np.arange(K, dtype=np.int64)[None, :]) % D
    ang = (2.0 * np.pi / D) * hk.astype(np.float64)
    a = np.zeros((c_pad, k_pad), dtype=np.float64)
    b = np.zeros((c_pad, k_pad), dtype=np.float64)
    a[: len(h), :K] = s[:, None] * np.cos(ang)
    b[: len(h), :K] = s[:, None] * np.sin(ang)
    n_k = k_pad // tk
    a = a.reshape(c_pad, n_k, tk)
    b = b.reshape(c_pad, n_k, tk)
    p = np.stack([a, b], axis=2).reshape(c_pad, 2 * k_pad)   # [.., n_k, 2, tk] flat
    return jnp.asarray(p, dtype=dtype)


# --------------------------------------------------------------------------- wrapper
def compact_bilinear_pooling(bottom1, bottom2, rand_h_1, rand_s_1, rand_h_2, rand_s_2,
                             output_dim, compute_dtype=jnp.bfloat16):
    """bottom1: [B, C1, H, W], bottom2: [B, C2, H, W] -> [B, output_dim] (sum_pool=True)."""
    B, C1, H, W = bottom1.shape
    _, C2, _, _ = bottom2.shape
    HW = H * W
    D = output_dim
    K = D // 2 + 1

    # ---- padding / tile choices ------------------------------------------------
    Kp = _round_up(K, 128)                  # lane-dense spectrum width
    if Kp % 512 == 0:
        TK = 512                            # spectrum tile (K-block) width
    elif Kp % 256 == 0:
        TK = 256
    else:
        TK = 128
    n_k = Kp // TK

    Cp1 = _round_up(C1, 128)                # lane-dense activation loads / MXU contraction
    Cp2 = _round_up(C2, 128)

    n_hw = max(1, _cdiv(HW, 512))           # spatial tiles, minimal padding, <=512 rows
    T_HW = _round_up(_cdiv(HW, n_hw), 8)
    HW_pad = T_HW * n_hw

    # NCHW -> [B, HW_pad, C_pad], zero-padded (zero rows/channels contribute nothing).
    def prep(x, C, Cp):
        x = jnp.transpose(x, (0, 2, 3, 1)).reshape(B, HW, C)
        x = jnp.pad(x, ((0, 0), (0, HW_pad - HW), (0, Cp - C)))
        return x.astype(compute_dtype)

    x1 = prep(bottom1, C1, Cp1)
    x2 = prep(bottom2, C2, Cp2)

    # Constants (in a real module these are built once at __init__).
    P1 = make_folded_projection(rand_h_1, rand_s_1, D, Cp1, Kp, TK, compute_dtype)
    P2 = make_folded_projection(rand_h_2, rand_s_2, D, Cp2, Kp, TK, compute_dtype)

    spec_out = pl.pallas_call(
        _cbp_spectrum_kernel,
        out_shape=jax.ShapeDtypeStruct((B, 1, 2 * Kp), jnp.float32),
        grid_spec=pltpu.PrefetchScalarGridSpec(
            num_scalar_prefetch=0,
            grid=(B, n_k, n_hw),
            in_specs=[
                pl.BlockSpec((1, T_HW, Cp1), lambda b, k, t: (b, t, 0)),
                pl.BlockSpec((1, T_HW, Cp2), lambda b, k, t: (b, t, 0)),
                pl.BlockSpec((Cp1, 2 * TK), lambda b, k, t: (0, k)),
                pl.BlockSpec((Cp2, 2 * TK), lambda b, k, t: (0, k)),
            ],
            out_specs=pl.BlockSpec((1, 1, 2 * TK), lambda b, k, t: (b, 0, k)),
        ),
        compiler_params=pltpu.CompilerParams(
            dimension_semantics=("parallel", "parallel", "arbitrary")),
    )(x1, x2, P1, P2)

    # De-interleave [pr | q] per K-block, strip padding.
    spec_out = spec_out[:, 0, :].reshape(B, n_k, 2, TK)
    pr = spec_out[:, :, 0, :].reshape(B, Kp)[:, :K]
    q = spec_out[:, :, 1, :].reshape(B, Kp)[:, :K]

    # Deferred inverse rDFT (linear, commutes with the spatial sum): tiny
    # [B, K] -> [B, D] irfft in plain XLA outside the hot kernel.
    # Full spectrum is Pr - i*Q (Q = -Im), Hermitian by construction.
    cbp = jnp.fft.irfft(pr - 1j * q, n=D, axis=-1) * D
    return cbp.astype(jnp.float32)
    # TODO(synk): sum_pool=False path ([B, D, H, W] output) not implemented.


# -------------------------------------------------------------------------- reference
def _dense_sketch(rand_h, rand_s, output_dim):
    m = np.zeros((len(rand_h), output_dim), dtype=np.float32)
    m[np.arange(len(rand_h)), np.asarray(rand_h, dtype=np.int64)] = np.asarray(
        rand_s, dtype=np.float32)
    return jnp.asarray(m)


def reference_cbp(bottom1, bottom2, rand_h_1, rand_s_1, rand_h_2, rand_s_2, output_dim):
    """Pure-JAX reference via jnp.fft (mirrors the PyTorch forward, sum_pool=True)."""
    B, C1, H, W = bottom1.shape
    _, C2, _, _ = bottom2.shape
    s1 = _dense_sketch(rand_h_1, rand_s_1, output_dim)
    s2 = _dense_sketch(rand_h_2, rand_s_2, output_dim)
    x1 = jnp.transpose(bottom1, (0, 2, 3, 1)).reshape(-1, C1)
    x2 = jnp.transpose(bottom2, (0, 2, 3, 1)).reshape(-1, C2)
    f1 = jnp.fft.fft(x1 @ s1, axis=-1)
    f2 = jnp.fft.fft(x2 @ s2, axis=-1)
    cbp = jnp.real(jnp.fft.ifft(f1 * f2, axis=-1)) * output_dim
    return cbp.reshape(B, H, W, output_dim).sum(axis=(1, 2))


if __name__ == "__main__":
    B, C1, C2, H, W = 2, 8, 8, 8, 8
    OUTPUT_DIM = 16

    key = jax.random.PRNGKey(0)
    k1, k2 = jax.random.split(key)
    bottom1 = jax.random.normal(k1, (B, C1, H, W), dtype=jnp.float32)
    bottom2 = jax.random.normal(k2, (B, C2, H, W), dtype=jnp.float32)

    # Same default seeds as the PyTorch module.
    np.random.seed(1)
    rand_h_1 = np.random.randint(OUTPUT_DIM, size=C1)
    np.random.seed(3)
    rand_s_1 = 2 * np.random.randint(2, size=C1) - 1
    np.random.seed(5)
    rand_h_2 = np.random.randint(OUTPUT_DIM, size=C2)
    np.random.seed(7)
    rand_s_2 = 2 * np.random.randint(2, size=C2) - 1

    ref = reference_cbp(bottom1, bottom2, rand_h_1, rand_s_1,
                        rand_h_2, rand_s_2, OUTPUT_DIM)
    ref_np = np.asarray(ref)

    # f32 compute path: tight check against the jnp.fft reference.
    out_f32 = compact_bilinear_pooling(bottom1, bottom2, rand_h_1, rand_s_1,
                                       rand_h_2, rand_s_2, OUTPUT_DIM,
                                       compute_dtype=jnp.float32)
    out_f32 = jax.block_until_ready(out_f32)
    assert out_f32.shape == (B, OUTPUT_DIM), out_f32.shape
    np.testing.assert_allclose(np.asarray(out_f32), ref_np, rtol=2e-3, atol=5e-3)

    # bf16 compute path (the performance configuration): loose relative-norm check.
    out_bf16 = compact_bilinear_pooling(bottom1, bottom2, rand_h_1, rand_s_1,
                                        rand_h_2, rand_s_2, OUTPUT_DIM,
                                        compute_dtype=jnp.bfloat16)
    out_bf16 = jax.block_until_ready(out_bf16)
    assert out_bf16.shape == (B, OUTPUT_DIM), out_bf16.shape
    rel = float(np.linalg.norm(np.asarray(out_bf16) - ref_np)
                / (np.linalg.norm(ref_np) + 1e-12))
    assert rel < 5e-2, f"bf16 relative error too large: {rel}"

    print("KERNEL_OK")
</pallas_src>

<mosaic_0001>
module attributes {stable_mosaic.version = 11 : i64} {
  func.func @_cbp_spectrum_kernel(%arg0: i32, %arg1: i32, %arg2: i32, %arg3: memref<1x64x128xf32, #tpu.memory_space<vmem>>, %arg4: memref<1x64x128xf32, #tpu.memory_space<vmem>>, %arg5: memref<128x256xf32, #tpu.memory_space<vmem>>, %arg6: memref<128x256xf32, #tpu.memory_space<vmem>>, %arg7: memref<1x1x256xf32, #tpu.memory_space<vmem>>) attributes {dimension_semantics = [#tpu.dimension_semantics<parallel>, #tpu.dimension_semantics<parallel>, #tpu.dimension_semantics<arbitrary>], iteration_bounds = array<i64: 2, 1, 1>, scalar_prefetch = 0 : i64, scratch_operands = 0 : i64, tpu.core_type = #tpu.core_type<tc>, window_params = [{transform_indices = @transform_0, window_bounds = array<i64: 1, 64, 128>}, {transform_indices = @transform_1, window_bounds = array<i64: 1, 64, 128>}, {transform_indices = @transform_2, window_bounds = array<i64: 128, 256>}, {transform_indices = @transform_3, window_bounds = array<i64: 128, 256>}, {transform_indices = @transform_4, window_bounds = array<i64: 1, 1, 256>}]} {
    %c0 = arith.constant 0 : index
    %c0_0 = arith.constant 0 : index
    %c0_1 = arith.constant 0 : index
    %0 = vector.load %arg3[%c0, %c0_0, %c0_1] : memref<1x64x128xf32, #tpu.memory_space<vmem>>, vector<1x64x128xf32>
    %1 = vector.shape_cast %0 : vector<1x64x128xf32> to vector<64x128xf32>
    %c0_2 = arith.constant 0 : index
    %c0_3 = arith.constant 0 : index
    %c0_4 = arith.constant 0 : index
    %2 = vector.load %arg4[%c0_2, %c0_3, %c0_4] : memref<1x64x128xf32, #tpu.memory_space<vmem>>, vector<1x64x128xf32>
    %3 = vector.shape_cast %2 : vector<1x64x128xf32> to vector<64x128xf32>
    %c0_5 = arith.constant 0 : index
    %c0_6 = arith.constant 0 : index
    %4 = vector.load %arg5[%c0_5, %c0_6] : memref<128x256xf32, #tpu.memory_space<vmem>>, vector<128x256xf32>
    %cst = arith.constant dense<0.000000e+00> : vector<64x256xf32>
    %5 = tpu.matmul %1, %4, %cst {dimension_numbers = #tpu.dot_dimension_numbers<[1], [0], [0], [1], [0, 0, 1, 1], [], []>} : vector<64x128xf32>, vector<128x256xf32>, vector<64x256xf32> -> vector<64x256xf32>
    %c0_7 = arith.constant 0 : index
    %c0_8 = arith.constant 0 : index
    %6 = vector.load %arg6[%c0_7, %c0_8] : memref<128x256xf32, #tpu.memory_space<vmem>>, vector<128x256xf32>
    %cst_9 = arith.constant dense<0.000000e+00> : vector<64x256xf32>
    %7 = tpu.matmul %3, %6, %cst_9 {dimension_numbers = #tpu.dot_dimension_numbers<[1], [0], [0], [1], [0, 0, 1, 1], [], []>} : vector<64x128xf32>, vector<128x256xf32>, vector<64x256xf32> -> vector<64x256xf32>
    %8 = vector.extract_strided_slice %5 {offsets = [0, 0], sizes = [64, 128], strides = [1, 1]} : vector<64x256xf32> to vector<64x128xf32>
    %9 = vector.extract_strided_slice %5 {offsets = [0, 128], sizes = [64, 128], strides = [1, 1]} : vector<64x256xf32> to vector<64x128xf32>
    %10 = vector.extract_strided_slice %7 {offsets = [0, 0], sizes = [64, 128], strides = [1, 1]} : vector<64x256xf32> to vector<64x128xf32>
    %11 = vector.extract_strided_slice %7 {offsets = [0, 128], sizes = [64, 128], strides = [1, 1]} : vector<64x256xf32> to vector<64x128xf32>
    %12 = arith.mulf %8, %10 : vector<64x128xf32>
    %13 = arith.mulf %9, %11 : vector<64x128xf32>
    %14 = arith.subf %12, %13 : vector<64x128xf32>
    %15 = arith.mulf %8, %11 : vector<64x128xf32>
    %16 = arith.mulf %9, %10 : vector<64x128xf32>
    %17 = arith.addf %15, %16 : vector<64x128xf32>
    %cst_10 = arith.constant dense<0.000000e+00> : vector<128xf32>
    %18 = vector.multi_reduction <add>, %14, %cst_10 [0] : vector<64x128xf32> to vector<128xf32>
    %19 = vector.shape_cast %18 : vector<128xf32> to vector<1x128xf32>
    %cst_11 = arith.constant dense<0.000000e+00> : vector<128xf32>
    %20 = vector.multi_reduction <add>, %17, %cst_11 [0] : vector<64x128xf32> to vector<128xf32>
    %21 = vector.shape_cast %20 : vector<128xf32> to vector<1x128xf32>
    %22 = tpu.concatenate %19, %21 in 1 : vector<1x128xf32>, vector<1x128xf32> -> vector<1x256xf32>
    %23 = vector.shape_cast %22 : vector<1x256xf32> to vector<1x1x256xf32>
    %c0_i32 = arith.constant 0 : i32
    %24 = arith.cmpi eq, %arg2, %c0_i32 : i32
    %25 = arith.extui %24 : i1 to i32
    %c0_i32_12 = arith.constant 0 : i32
    %26 = arith.cmpi ne, %25, %c0_i32_12 : i32
    scf.if %26 {
      %cst_19 = arith.constant 0.000000e+00 : f32
      %30 = vector.broadcast %cst_19 : f32 to vector<1x1x256xf32>
      %c0_20 = arith.constant 0 : index
      %c0_21 = arith.constant 0 : index
      %c0_22 = arith.constant 0 : index
      %31 = vector.load %arg7[%c0_20, %c0_21, %c0_22] : memref<1x1x256xf32, #tpu.memory_space<vmem>>, vector<1x1x256xf32>
      tpu.vector_store %arg7[%c0_20, %c0_21, %c0_22], %30 {strides = array<i32>} : memref<1x1x256xf32, #tpu.memory_space<vmem>>, vector<1x1x256xf32>,
    } else {
    }
    %c0_13 = arith.constant 0 : index
    %c0_14 = arith.constant 0 : index
    %c0_15 = arith.constant 0 : index
    %27 = vector.load %arg7[%c0_13, %c0_14, %c0_15] : memref<1x1x256xf32, #tpu.memory_space<vmem>>, vector<1x1x256xf32>
    %28 = arith.addf %27, %23 : vector<1x1x256xf32>
    %c0_16 = arith.constant 0 : index
    %c0_17 = arith.constant 0 : index
    %c0_18 = arith.constant 0 : index
    %29 = vector.load %arg7[%c0_16, %c0_17, %c0_18] : memref<1x1x256xf32, #tpu.memory_space<vmem>>, vector<1x1x256xf32>
    tpu.vector_store %arg7[%c0_16, %c0_17, %c0_18], %28 {strides = array<i32>} : memref<1x1x256xf32, #tpu.memory_space<vmem>>, vector<1x1x256xf32>,
    return
  }
  func.func @transform_0(%arg0: i32, %arg1: i32, %arg2: i32) -> (i32, i32, i32) {
    %c0_i32 = arith.constant 0 : i32
    %c0_i32_0 = arith.constant 0 : i32
    return %arg0, %arg2, %c0_i32 : i32, i32, i32
  }
  func.func @transform_1(%arg0: i32, %arg1: i32, %arg2: i32) -> (i32, i32, i32) {
    %c0_i32 = arith.constant 0 : i32
    %c0_i32_0 = arith.constant 0 : i32
    return %arg0, %arg2, %c0_i32 : i32, i32, i32
  }
  func.func @transform_2(%arg0: i32, %arg1: i32, %arg2: i32) -> (i32, i32) {
    %c0_i32 = arith.constant 0 : i32
    %c0_i32_0 = arith.constant 0 : i32
    return %c0_i32, %arg1 : i32, i32
  }
  func.func @transform_3(%arg0: i32, %arg1: i32, %arg2: i32) -> (i32, i32) {
    %c0_i32 = arith.constant 0 : i32
    %c0_i32_0 = arith.constant 0 : i32
    return %c0_i32, %arg1 : i32, i32
  }
  func.func @transform_4(%arg0: i32, %arg1: i32, %arg2: i32) -> (i32, i32, i32) {
    %c0_i32 = arith.constant 0 : i32
    %c0_i32_0 = arith.constant 0 : i32
    return %arg0, %c0_i32, %arg1 : i32, i32, i32
  }
}

</mosaic_0001>

<llo_original>
// kernel: tpu_custom_call.1
$region0: #{tpu_custom_call.1}
  #allocation0 [shape = 'u32[]', space=smem, size = 0x4, offset = 0x4, fixed_abs, tag = 'smem constant byte address 0x4 - core index']
  #allocation1 [shape = 'u32[144,128]{1,0:T(1,128)}', space=vmem, size = 0x12000, scoped, tag = 'internal scratch']
  %s0 = inlined_call_operand.hbm [shape: f32[2,64,128], index: 0, kind: input, shape index: {}]
  %s1 = inlined_call_operand.hbm [shape: f32[2,64,128], index: 1, kind: input, shape index: {}]
  %s2 = inlined_call_operand.hbm [shape: f32[128,256], index: 2, kind: input, shape index: {}]
  %s3 = inlined_call_operand.hbm [shape: f32[128,256], index: 3, kind: input, shape index: {}]
  %s4 = inlined_call_operand.hbm [shape: f32[2,1,256], index: 4, kind: output, shape index: {}]
  %s5 = sld [smem:[#allocation0]]
  $region69: #{tpu_custom_call.1} parent=0
    _
  %s7 = ssub.s32 1, %s5
  %s8 = scalar_select 0, %s7, %s5
  $region1: #{tpu_custom_call.1} parent=0
    #allocation2 [shape = 'u8[65536]{0}', space=vmem, size = 0x10000, scoped, tag = 'input window, operand 0']
    #allocation3 [shape = 's32[2]{0}', space=sflag, size = 0x8, scoped, tag = 'scoped memory for tpu_custom_call.1']
    #allocation4 [shape = 's32[2]{0}', space=sflag, size = 0x8, scoped, tag = 'scoped memory for tpu_custom_call.1']
    #allocation5 [shape = 'u8[65536]{0}', space=vmem, size = 0x10000, scoped, tag = 'input window, operand 1']
    #allocation6 [shape = 's32[2]{0}', space=sflag, size = 0x8, scoped, tag = 'scoped memory for tpu_custom_call.1']
    #allocation7 [shape = 'u8[131072]{0}', space=vmem, size = 0x20000, scoped, tag = 'input window, operand 2, single buffered']
    #allocation8 [shape = 'u8[131072]{0}', space=vmem, size = 0x20000, scoped, tag = 'input window, operand 3, single buffered']
    #allocation9 [shape = 's32[1]{0}', space=sflag, size = 0x4, scoped, tag = 'scoped memory for tpu_custom_call.1']
    #allocation10 [shape = 'u8[2048]{0}', space=vmem, size = 0x800, scoped, tag = 'output window, operand 0']
    %9 = vsyncpa [#allocation3], 0
    %s10 = scalar_lea.sflag [#allocation3], 1
    %11 = vsyncpa %s10, 0
    %12 = vsyncpa [#allocation6], 0
    %s13 = scalar_lea.sflag [#allocation6], 1
    %14 = vsyncpa %s13, 0
    %15 = vsyncpa [#allocation9], 0
    %16 = vsyncpa [#allocation4], 0
    %s17 = scalar_lea.sflag [#allocation4], 1
    %18 = vsyncpa %s17, 0
    loop: start=0, step=1, limit=4
    $region2: #{tpu_custom_call.1} parent=1 // loop_pre_header
      _
    $region3: #{tpu_custom_call.1} parent=1 // loop_header
      %s20 = sphi 0, %s24
      %p21 = scmp.ge.s32.totalorder %s20, 4
      %s27 = sphi 0, %s46
      %s28 = sphi 0, %s42
      %s29 = sphi 0, %s38
      %s30 = sphi 0, %s27
      %s31 = sphi 0, %s28
      %s32 = sphi 0, %s29
      %s33 = sphi 0, %s30
      %s34 = sphi 0, %s31
      %s35 = sphi 0, %s32
      %s51 = sphi 0, %s53
      %s54 = sphi 0, %s51
      %s55 = sphi 0, %s54
      %s71 = sphi 0, %s55
      %s79 = sphi 0, %s81
      %s82 = sphi 0, %s79
      %s83 = sphi 0, %s82
      %s99 = sphi 0, %s83
      %s105 = sphi 0, %s107
      %s108 = sphi 0, %s105
      %s109 = sphi 0, %s108
      %s125 = sphi 0, %s109
      %s131 = sphi 0, %s133
      %s134 = sphi 0, %s131
      %s135 = sphi 0, %s134
      %s151 = sphi 0, %s135
      %s159 = sphi 0, %s161
      %s162 = sphi 0, %s159
      %s163 = sphi 0, %s162
      %s179 = sphi 0, %s163
    $region4: #{tpu_custom_call.1} parent=1 // loop_header_branch
      %23 = sbr.rel (%p21) target = $region8
    $region5: #{tpu_custom_call.1} parent=1 // loop_body
      %s25 = ssub.s32 %s20, 1
      %s26 = ssub.s32 %s20, 2
      %s36 = sadd.s32 1, %s29
      %p37 = scmp.ge.s32.totalorder %s36, 1
      %s38 = scalar_select %p37, 0, %s36
      %s39 = sadd.s32 1, %s28
      %s40 = scalar_select %p37, %s39, %s28
      %p41 = scmp.ge.s32.totalorder %s40, 1
      %s42 = scalar_select %p41, 0, %s40
      %s43 = sadd.s32 1, %s27
      %s44 = scalar_select %p41, %s43, %s27
      %p45 = scmp.ge.s32.totalorder %s44, 2
      %s46 = scalar_select %p45, 0, %s44
      %s47 = ssub.s32 %s27, %s46
      %s48 = ssub.s32 %s29, %s38
      %s49 = sor.u32 %s47, %s48
      %p50 = scmp.eq.s32.totalorder %s49, 0
      %s52 = sadd.s32 %s51, 1
      %s53 = scalar_select %p50, %s51, %s52
      %p56 = pneg %p50
      %p57 = scmp.eq.s32.totalorder %s20, 1
      %p58 = por %p56, %p57
      %p59 = scmp.ne.s32.totalorder %s51, %s54
      %p60 = scmp.eq.s32.totalorder %s20, 0
      %p61 = por %p59, %p60
      %p62 = scmp.ne.s32.totalorder %s51, %s54
      %p63 = scmp.eq.s32.totalorder %s25, 1
      %p64 = por %p62, %p63
      %p65 = scmp.ne.s32.totalorder %s54, %s55
      %p66 = scmp.eq.s32.totalorder %s25, 0
      %p67 = por %p65, %p66
      %p68 = scmp.ne.s32.totalorder %s54, %s55
      %p69 = scmp.eq.s32.totalorder %s26, 1
      %p70 = por %p68, %p69
      %p72 = scmp.ne.s32.totalorder %s55, %s71
      %p73 = scmp.eq.s32.totalorder %s26, 0
      %p74 = por %p72, %p73
      %s75 = ssub.s32 %s27, %s46
      %s76 = ssub.s32 %s29, %s38
      %s77 = sor.u32 %s75, %s76
      %p78 = scmp.eq.s32.totalorder %s77, 0
      %s80 = sadd.s32 %s79, 1
      %s81 = scalar_select %p78, %s79, %s80
      %p84 = pneg %p78
      %p85 = scmp.eq.s32.totalorder %s20, 1
      %p86 = por %p84, %p85
      %p87 = scmp.ne.s32.totalorder %s79, %s82
      %p88 = scmp.eq.s32.totalorder %s20, 0
      %p89 = por %p87, %p88
      %p90 = scmp.ne.s32.totalorder %s79, %s82
      %p91 = scmp.eq.s32.totalorder %s25, 1
      %p92 = por %p90, %p91
      %p93 = scmp.ne.s32.totalorder %s82, %s83
      %p94 = scmp.eq.s32.totalorder %s25, 0
      %p95 = por %p93, %p94
      %p96 = scmp.ne.s32.totalorder %s82, %s83
      %p97 = scmp.eq.s32.totalorder %s26, 1
      %p98 = por %p96, %p97
      %p100 = scmp.ne.s32.totalorder %s83, %s99
      %p101 = scmp.eq.s32.totalorder %s26, 0
      %p102 = por %p100, %p101
      %s103 = ssub.s32 %s28, %s42
      %p104 = scmp.eq.s32.totalorder %s103, 0
      %s106 = sadd.s32 %s105, 1
      %s107 = scalar_select %p104, %s105, %s106
      %p110 = pneg %p104
      %p111 = scmp.eq.s32.totalorder %s20, 1
      %p112 = por %p110, %p111
      %p113 = scmp.ne.s32.totalorder %s105, %s108
      %p114 = scmp.eq.s32.totalorder %s20, 0
      %p115 = por %p113, %p114
      %p116 = scmp.ne.s32.totalorder %s105, %s108
      %p117 = scmp.eq.s32.totalorder %s25, 1
      %p118 = por %p116, %p117
      %p119 = scmp.ne.s32.totalorder %s108, %s109
      %p120 = scmp.eq.s32.totalorder %s25, 0
      %p121 = por %p119, %p120
      %p122 = scmp.ne.s32.totalorder %s108, %s109
      %p123 = scmp.eq.s32.totalorder %s26, 1
      %p124 = por %p122, %p123
      %p126 = scmp.ne.s32.totalorder %s109, %s125
      %p127 = scmp.eq.s32.totalorder %s26, 0
      %p128 = por %p126, %p127
      %s129 = ssub.s32 %s28, %s42
      %p130 = scmp.eq.s32.totalorder %s129, 0
      %s132 = sadd.s32 %s131, 1
      %s133 = scalar_select %p130, %s131, %s132
      %p136 = pneg %p130
      %p137 = scmp.eq.s32.totalorder %s20, 1
      %p138 = por %p136, %p137
      %p139 = scmp.ne.s32.totalorder %s131, %s134
      %p140 = scmp.eq.s32.totalorder %s20, 0
      %p141 = por %p139, %p140
      %p142 = scmp.ne.s32.totalorder %s131, %s134
      %p143 = scmp.eq.s32.totalorder %s25, 1
      %p144 = por %p142, %p143
      %p145 = scmp.ne.s32.totalorder %s134, %s135
      %p146 = scmp.eq.s32.totalorder %s25, 0
      %p147 = por %p145, %p146
      %p148 = scmp.ne.s32.totalorder %s134, %s135
      %p149 = scmp.eq.s32.totalorder %s26, 1
      %p150 = por %p148, %p149
      %p152 = scmp.ne.s32.totalorder %s135, %s151
      %p153 = scmp.eq.s32.totalorder %s26, 0
      %p154 = por %p152, %p153
      %s155 = ssub.s32 %s27, %s46
      %s156 = ssub.s32 %s28, %s42
      %s157 = sor.u32 %s155, %s156
      %p158 = scmp.eq.s32.totalorder %s157, 0
      %s160 = sadd.s32 %s159, 1
      %s161 = scalar_select %p158, %s159, %s160
      %p164 = pneg %p158
      %p165 = scmp.eq.s32.totalorder %s20, 1
      %p166 = por %p164, %p165
      %p167 = scmp.ne.s32.totalorder %s159, %s162
      %p168 = scmp.eq.s32.totalorder %s20, 0
      %p169 = por %p167, %p168
      %p170 = scmp.ne.s32.totalorder %s159, %s162
      %p171 = scmp.eq.s32.totalorder %s25, 1
      %p172 = por %p170, %p171
      %p173 = scmp.ne.s32.totalorder %s162, %s163
      %p174 = scmp.eq.s32.totalorder %s25, 0
      %p175 = por %p173, %p174
      %p176 = scmp.ne.s32.totalorder %s162, %s163
      %p177 = scmp.eq.s32.totalorder %s26, 1
      %p178 = por %p176, %p177
      %p180 = scmp.ne.s32.totalorder %s163, %s179
      %p181 = scmp.eq.s32.totalorder %s26, 0
      %p182 = por %p180, %p181
      %p183 = scmp.le.s32.totalorder 1, %s20
      %p184 = scmp.lt.s32.totalorder %s20, 3
      %p185 = pnand %p183, %p184
      %p186 = pneg %p185
      // Predicated region
      $region9: #{tpu_custom_call.1} parent=5 // pred_check
        _
      $region10: #{tpu_custom_call.1} parent=5 // pred_check_branch
        %188 = sbr.rel (%p185) target = $region12
      $region11: #{tpu_custom_call.1} parent=5 // pred_region
        %s189 = ssub.s32 %s20, 1
        // Predicated region
        $region13: #{tpu_custom_call.1} parent=11 // pred_check
          %p190 = pneg %p121
        $region14: #{tpu_custom_call.1} parent=11 // pred_check_branch
          %192 = sbr.rel (%p190) target = $region16
        $region15: #{tpu_custom_call.1} parent=11 // pred_region
          %s193 = smul.u32 2, %s31
          %s195 = ssub.s32 4096, 4096
          %196 = vsyncadd [#allocation6], %s195
          %s197 = smul.addr %s193, 128
          %s198 = scalar_lea.hbm %s2, %s197
          %s199 = sshll.u32 [#allocation7], 4
          %s200 = int_to_ptr.vmem [resolvable:$true] %s199
          %205 = dma.hbm_to_vmem [thread:$0]  %s198, 4096, %s200, [#allocation6], 256, 256, 16
        $region16: #{tpu_custom_call.1} parent=11 // pred_fallthru
          _
        // Predicated region
        $region17: #{tpu_custom_call.1} parent=11 // pred_check
          %p206 = pneg %p147
        $region18: #{tpu_custom_call.1} parent=11 // pred_check_branch
          %208 = sbr.rel (%p206) target = $region20
        $region19: #{tpu_custom_call.1} parent=11 // pred_region
          %s209 = smul.u32 2, %s31
          %s211 = ssub.s32 4096, 4096
          %212 = vsyncadd [#allocation9], %s211
          %s213 = smul.addr %s209, 128
          %s214 = scalar_lea.hbm %s3, %s213
          %s215 = sshll.u32 [#allocation8], 4
          %s216 = int_to_ptr.vmem [resolvable:$true] %s215
          %221 = dma.hbm_to_vmem [thread:$0]  %s214, 4096, %s216, [#allocation9], 256, 256, 16
        $region20: #{tpu_custom_call.1} parent=11 // pred_fallthru
          _
      $region12: #{tpu_custom_call.1} parent=5 // pred_fallthru
        _
      %p222 = scmp.lt.s32.totalorder %s20, 2
      // Predicated region
      $region21: #{tpu_custom_call.1} parent=5 // pred_check
        %p223 = pneg %p222
      $region22: #{tpu_custom_call.1} parent=5 // pred_check_branch
        %225 = sbr.rel (%p223) target = $region24
      $region23: #{tpu_custom_call.1} parent=5 // pred_region
        // Predicated region
        $region25: #{tpu_custom_call.1} parent=23 // pred_check
          %p226 = pneg %p61
        $region26: #{tpu_custom_call.1} parent=23 // pred_check_branch
          %228 = sbr.rel (%p226) target = $region28
        $region27: #{tpu_custom_call.1} parent=23 // pred_region
          %s229 = sand.u32 %s51, 1
          %s230 = scalar_lea.sflag [#allocation3], %s229
          %s231 = sand.u32 %s51, 1
          %s232 = smul.addr %s231, 64
          %s233 = scalar_lea.vmem [#allocation2], %s232
          %s234 = smul.u32 8, %s29
          %s236 = ssub.s32 1024, 1024
          %237 = vsyncadd %s230, %s236
          %s238 = smul.addr %s27, 8
          %s239 = sadd.s32 %s234, %s238
          %s240 = smul.addr %s239, 128
          %s241 = scalar_lea.hbm %s0, %s240
          %s242 = sshll.u32 %s233, 4
          %s243 = int_to_ptr.vmem [resolvable:$true] %s242
          %248 = dma.hbm_to_vmem [thread:$0]  %s241, 1024, %s243, %s230, 128, 128, 8
        $region28: #{tpu_custom_call.1} parent=23 // pred_fallthru
          _
        // Predicated region
        $region29: #{tpu_custom_call.1} parent=23 // pred_check
          %p249 = pneg %p89
        $region30: #{tpu_custom_call.1} parent=23 // pred_check_branch
          %251 = sbr.rel (%p249) target = $region32
        $region31: #{tpu_custom_call.1} parent=23 // pred_region
          %s252 = sand.u32 %s20, 1
          %s253 = scalar_lea.sflag [#allocation6], %s252
          %s254 = sand.u32 %s79, 1
          %s255 = smul.addr %s254, 64
          %s256 = scalar_lea.vmem [#allocation5], %s255
          %s257 = smul.u32 8, %s29
          %s259 = ssub.s32 1024, 1024
          %260 = vsyncadd %s253, %s259
          %s261 = smul.addr %s27, 8
          %s262 = sadd.s32 %s257, %s261
          %s263 = smul.addr %s262, 128
          %s264 = scalar_lea.hbm %s1, %s263
          %s265 = sshll.u32 %s256, 4
          %s266 = int_to_ptr.vmem [resolvable:$true] %s265
          %271 = dma.hbm_to_vmem [thread:$0]  %s264, 1024, %s266, %s253, 128, 128, 8
        $region32: #{tpu_custom_call.1} parent=23 // pred_fallthru
          _
      $region24: #{tpu_custom_call.1} parent=5 // pred_fallthru
        _
      %p272 = scmp.le.s32.totalorder 1, %s20
      %p273 = scmp.lt.s32.totalorder %s20, 3
      %p274 = pnand %p272, %p273
      %p275 = pneg %p274
      // Predicated region
      $region33: #{tpu_custom_call.1} parent=5 // pred_check
        _
      $region34: #{tpu_custom_call.1} parent=5 // pred_check_branch
        %277 = sbr.rel (%p274) target = $region36
      $region35: #{tpu_custom_call.1} parent=5 // pred_region
        %s278 = ssub.s32 %s20, 1
        %s279 = sand.u32 %s54, 1
        %s280 = scalar_lea.sflag [#allocation3], %s279
        %s281 = sand.u32 %s54, 1
        %s282 = smul.addr %s281, 64
        %s283 = scalar_lea.vmem [#allocation2], %s282
        // Predicated region
        $region37: #{tpu_custom_call.1} parent=35 // pred_check
          %p284 = pneg %p67
        $region38: #{tpu_custom_call.1} parent=35 // pred_check_branch
          %286 = sbr.rel (%p284) target = $region40
        $region39: #{tpu_custom_call.1} parent=35 // pred_region
          %287 = dma.done %s280, 1024
        $region40: #{tpu_custom_call.1} parent=35 // pred_fallthru
          _
        %s288 = sand.u32 %s25, 1
        %s289 = scalar_lea.sflag [#allocation6], %s288
        %s290 = sand.u32 %s82, 1
        %s291 = smul.addr %s290, 64
        %s292 = scalar_lea.vmem [#allocation5], %s291
        // Predicated region
        $region41: #{tpu_custom_call.1} parent=35 // pred_check
          %p293 = pneg %p95
        $region42: #{tpu_custom_call.1} parent=35 // pred_check_branch
          %295 = sbr.rel (%p293) target = $region44
        $region43: #{tpu_custom_call.1} parent=35 // pred_region
          %296 = dma.done %s289, 1024
        $region44: #{tpu_custom_call.1} parent=35 // pred_fallthru
          _
        // Predicated region
        $region45: #{tpu_custom_call.1} parent=35 // pred_check
          %p297 = pneg %p121
        $region46: #{tpu_custom_call.1} parent=35 // pred_check_branch
          %299 = sbr.rel (%p297) target = $region48
        $region47: #{tpu_custom_call.1} parent=35 // pred_region
          %300 = dma.done [#allocation6], 4096
        $region48: #{tpu_custom_call.1} parent=35 // pred_fallthru
          _
        // Predicated region
        $region49: #{tpu_custom_call.1} parent=35 // pred_check
          %p301 = pneg %p147
        $region50: #{tpu_custom_call.1} parent=35 // pred_check_branch
          %303 = sbr.rel (%p301) target = $region52
        $region51: #{tpu_custom_call.1} parent=35 // pred_region
          %304 = dma.done [#allocation9], 4096
        $region52: #{tpu_custom_call.1} parent=35 // pred_fallthru
          _
        %s305 = sand.u32 %s54, 1
        %s306 = scalar_lea.sflag [#allocation3], %s305
        %s307 = sand.u32 %s54, 1
        %s308 = smul.addr %s307, 64
        %s309 = scalar_lea.vmem [#allocation2], %s308
        %p310 = pneg %p67
        %p311 = pneg %p64
        %s312 = sand.u32 %s25, 1
        %s313 = scalar_lea.sflag [#allocation6], %s312
        %s314 = sand.u32 %s82, 1
        %s315 = smul.addr %s314, 64
        %s316 = scalar_lea.vmem [#allocation5], %s315
        %p317 = pneg %p95
        %p318 = pneg %p92
        %p319 = pneg %p121
        %p320 = pneg %p118
        %p321 = pneg %p147
        %p322 = pneg %p144
        %p323 = pneg %p175
        %p324 = pneg %p172
        %s325 = sand.u32 %s162, 1
        %s326 = scalar_lea.sflag [#allocation4], %s325
        %s327 = sand.u32 %s162, 1
        %s328 = smul.addr %s327, 2
        %s329 = scalar_lea.vmem [#allocation10], %s328
        %s330 = smul.u32 8, %s32
        %s331 = smul.u32 8, %s32
        %s332 = smul.u32 2, %s31
        %s333 = smul.u32 2, %s31
        %s334 = smul.u32 2, %s31
        %v335 = vld [vmem:[%s283] sm:$0xff]
        %v336 = vld [vmem:[%s283 + $0x8] sm:$0xff]
        %v337 = vld [vmem:[%s283 + $0x10] sm:$0xff]
        %v338 = vld [vmem:[%s283 + $0x18] sm:$0xff]
        %v339 = vld [vmem:[%s283 + $0x20] sm:$0xff]
        %v340 = vld [vmem:[%s283 + $0x28] sm:$0xff]
        %v341 = vld [vmem:[%s283 + $0x30] sm:$0xff]
        %v342 = vld [vmem:[%s283 + $0x38] sm:$0xff]
        %v343 = vld [vmem:[%s292] sm:$0xff]
        %v344 = vld [vmem:[%s292 + $0x8] sm:$0xff]
        %v345 = vld [vmem:[%s292 + $0x10] sm:$0xff]
        %v346 = vld [vmem:[%s292 + $0x18] sm:$0xff]
        %v347 = vld [vmem:[%s292 + $0x20] sm:$0xff]
        %v348 = vld [vmem:[%s292 + $0x28] sm:$0xff]
        %v349 = vld [vmem:[%s292 + $0x30] sm:$0xff]
        %v350 = vld [vmem:[%s292 + $0x38] sm:$0xff]
        %v351 = vld [vmem:[#allocation7] sm:$0xff]
        %v352 = vld [vmem:[#allocation7 + $0x8] sm:$0xff]
        %v353 = vld [vmem:[#allocation7 + $0x10] sm:$0xff]
        %v354 = vld [vmem:[#allocation7 + $0x18] sm:$0xff]
        %v355 = vld [vmem:[#allocation7 + $0x20] sm:$0xff]
        %v356 = vld [vmem:[#allocation7 + $0x28] sm:$0xff]
        %v357 = vld [vmem:[#allocation7 + $0x30] sm:$0xff]
        %v358 = vld [vmem:[#allocation7 + $0x38] sm:$0xff]
        %v359 = vld [vmem:[#allocation7 + $0x40] sm:$0xff]
        %v360 = vld [vmem:[#allocation7 + $0x48] sm:$0xff]
        %v361 = vld [vmem:[#allocation7 + $0x50] sm:$0xff]
        %v362 = vld [vmem:[#allocation7 + $0x58] sm:$0xff]
        %v363 = vld [vmem:[#allocation7 + $0x60] sm:$0xff]
        %v364 = vld [vmem:[#allocation7 + $0x68] sm:$0xff]
        %v365 = vld [vmem:[#allocation7 + $0x70] sm:$0xff]
        %v366 = vld [vmem:[#allocation7 + $0x78] sm:$0xff]
        %v367 = vld [vmem:[#allocation7 + $0x80] sm:$0xff]
        %v368 = vld [vmem:[#allocation7 + $0x88] sm:$0xff]
        %v369 = vld [vmem:[#allocation7 + $0x90] sm:$0xff]
        %v370 = vld [vmem:[#allocation7 + $0x98] sm:$0xff]
        %v371 = vld [vmem:[#allocation7 + $0xa0] sm:$0xff]
        %v372 = vld [vmem:[#allocation7 + $0xa8] sm:$0xff]
        %v373 = vld [vmem:[#allocation7 + $0xb0] sm:$0xff]
        %v374 = vld [vmem:[#allocation7 + $0xb8] sm:$0xff]
        %v375 = vld [vmem:[#allocation7 + $0xc0] sm:$0xff]
        %v376 = vld [vmem:[#allocation7 + $0xc8] sm:$0xff]
        %v377 = vld [vmem:[#allocation7 + $0xd0] sm:$0xff]
        %v378 = vld [vmem:[#allocation7 + $0xd8] sm:$0xff]
        %v379 = vld [vmem:[#allocation7 + $0xe0] sm:$0xff]
        %v380 = vld [vmem:[#allocation7 + $0xe8] sm:$0xff]
        %v381 = vld [vmem:[#allocation7 + $0xf0] sm:$0xff]
        %v382 = vld [vmem:[#allocation7 + $0xf8] sm:$0xff]
        %383 = vmatprep.subr.mxu0 %v382
        %384 = vmatpush1.msra.mxu0 %v381
        %385 = vmatprep.subr.mxu0 %v380
        %386 = vmatpush1.msra.mxu0 %v379
        %387 = vmatprep.subr.mxu0 %v378
        %388 = vmatpush1.msra.mxu0 %v377
        %389 = vmatprep.subr.mxu0 %v376
        %390 = vmatpush1.msra.mxu0 %v375
        %391 = vmatprep.subr.mxu0 %v374
        %392 = vmatpush1.msra.mxu0 %v373
        %393 = vmatprep.subr.mxu0 %v372
        %394 = vmatpush1.msra.mxu0 %v371
        %395 = vmatprep.subr.mxu0 %v370
        %396 = vmatpush1.msra.mxu0 %v369
        %397 = vmatprep.subr.mxu0 %v368
        %398 = vmatpush1.msra.mxu0 %v367
        %399 = vmatprep.subr.mxu0 %v366
        %400 = vmatpush1.msra.mxu0 %v365
        %401 = vmatprep.subr.mxu0 %v364
        %402 = vmatpush1.msra.mxu0 %v363
        %403 = vmatprep.subr.mxu0 %v362
        %404 = vmatpush1.msra.mxu0 %v361
        %405 = vmatprep.subr.mxu0 %v360
        %406 = vmatpush1.msra.mxu0 %v359
        %407 = vmatprep.subr.mxu0 %v358
        %408 = vmatpush1.msra.mxu0 %v357
        %409 = vmatprep.subr.mxu0 %v356
        %410 = vmatpush1.msra.mxu0 %v355
        %411 = vmatprep.subr.mxu0 %v354
        %412 = vmatpush1.msra.mxu0 %v353
        %413 = vmatprep.subr.mxu0 %v352
        %414 = vmatpush1.msra.mxu0 %v351
        %415 = vmatprep.subr.mxu0 0.0
        %416 = vmatpush2.msra.mxu0 0.0
        %417 = vmatprep.subr.mxu0 0.0
        %418 = vmatpush2.msra.mxu0 0.0
        %419 = vmatprep.subr.mxu0 0.0
        %420 = vmatpush2.msra.mxu0 0.0
        %421 = vmatprep.subr.mxu0 0.0
        %422 = vmatpush2.msra.mxu0 0.0
        %423 = vmatprep.subr.mxu0 0.0
        %424 = vmatpush2.msra.mxu0 0.0
        %425 = vmatprep.subr.mxu0 0.0
        %426 = vmatpush2.msra.mxu0 0.0
        %427 = vmatprep.subr.mxu0 0.0
        %428 = vmatpush2.msra.mxu0 0.0
        %429 = vmatprep.subr.mxu0 0.0
        %430 = vmatpush2.msra.mxu0 0.0
        %431 = vmatprep.subr.mxu0 0.0
        %432 = vmatpush2.msra.mxu0 0.0
        %433 = vmatprep.subr.mxu0 0.0
        %434 = vmatpush2.msra.mxu0 0.0
        %435 = vmatprep.subr.mxu0 0.0
        %436 = vmatpush2.msra.mxu0 0.0
        %437 = vmatprep.subr.mxu0 0.0
        %438 = vmatpush2.msra.mxu0 0.0
        %439 = vmatprep.subr.mxu0 0.0
        %440 = vmatpush2.msra.mxu0 0.0
        %441 = vmatprep.subr.mxu0 0.0
        %442 = vmatpush2.msra.mxu0 0.0
        %443 = vmatprep.subr.mxu0 0.0
        %444 = vmatpush2.msra.mxu0 0.0
        %445 = vmatprep.subr.mxu0 0.0
        %446 = vmatpush2.msra.mxu0 0.0
        %447 = vmatprep.mubr.f32.mxu0 0.0
        %448 = vmatmul.mubr.f32.gmra.mxu0 %v335
        %v449 = vpop.f32.mrf.mxu0
        %v450 = vadd.f32 0.0, %v449
        %v451 = vpop.f32.mrf.mxu0
        %v452 = vadd.f32 0.0, %v451
        %453 = vmatprep.mubr.f32.mxu0 0.0
        %454 = vmatmul.mubr.f32.gmra.mxu0 %v336
        %v455 = vpop.f32.mrf.mxu0
        %v456 = vadd.f32 0.0, %v455
        %v457 = vpop.f32.mrf.mxu0
        %v458 = vadd.f32 0.0, %v457
        %459 = vmatprep.mubr.f32.mxu0 0.0
        %460 = vmatmul.mubr.f32.gmra.mxu0 %v337
        %v461 = vpop.f32.mrf.mxu0
        %v462 = vadd.f32 0.0, %v461
        %v463 = vpop.f32.mrf.mxu0
        %v464 = vadd.f32 0.0, %v463
        %465 = vmatprep.mubr.f32.mxu0 0.0
        %466 = vmatmul.mubr.f32.gmra.mxu0 %v338
        %v467 = vpop.f32.mrf.mxu0
        %v468 = vadd.f32 0.0, %v467
        %v469 = vpop.f32.mrf.mxu0
        %v470 = vadd.f32 0.0, %v469
        %471 = vmatprep.mubr.f32.mxu0 0.0
        %472 = vmatmul.mubr.f32.gmra.mxu0 %v339
        %v473 = vpop.f32.mrf.mxu0
        %v474 = vadd.f32 0.0, %v473
        %v475 = vpop.f32.mrf.mxu0
        %v476 = vadd.f32 0.0, %v475
        %477 = vmatprep.mubr.f32.mxu0 0.0
        %478 = vmatmul.mubr.f32.gmra.mxu0 %v340
        %v479 = vpop.f32.mrf.mxu0
        %v480 = vadd.f32 0.0, %v479
        %v481 = vpop.f32.mrf.mxu0
        %v482 = vadd.f32 0.0, %v481
        %483 = vmatprep.mubr.f32.mxu0 0.0
        %484 = vmatmul.mubr.f32.gmra.mxu0 %v341
        %v485 = vpop.f32.mrf.mxu0
        %v486 = vadd.f32 0.0, %v485
        %v487 = vpop.f32.mrf.mxu0
        %v488 = vadd.f32 0.0, %v487
        %489 = vmatprep.mubr.f32.mxu0 0.0
        %490 = vmatmul.mubr.f32.gmra.mxu0 %v342
        %v491 = vpop.f32.mrf.mxu0
        %v492 = vadd.f32 0.0, %v491
        %v493 = vpop.f32.mrf.mxu0
        %v494 = vadd.f32 0.0, %v493
        %495 = vdwg.mxu0
        %v496 = vld [vmem:[#allocation8] sm:$0xff]
        %v497 = vld [vmem:[#allocation8 + $0x8] sm:$0xff]
        %v498 = vld [vmem:[#allocation8 + $0x10] sm:$0xff]
        %v499 = vld [vmem:[#allocation8 + $0x18] sm:$0xff]
        %v500 = vld [vmem:[#allocation8 + $0x20] sm:$0xff]
        %v501 = vld [vmem:[#allocation8 + $0x28] sm:$0xff]
        %v502 = vld [vmem:[#allocation8 + $0x30] sm:$0xff]
        %v503 = vld [vmem:[#allocation8 + $0x38] sm:$0xff]
        %v504 = vld [vmem:[#allocation8 + $0x40] sm:$0xff]
        %v505 = vld [vmem:[#allocation8 + $0x48] sm:$0xff]
        %v506 = vld [vmem:[#allocation8 + $0x50] sm:$0xff]
        %v507 = vld [vmem:[#allocation8 + $0x58] sm:$0xff]
        %v508 = vld [vmem:[#allocation8 + $0x60] sm:$0xff]
        %v509 = vld [vmem:[#allocation8 + $0x68] sm:$0xff]
        %v510 = vld [vmem:[#allocation8 + $0x70] sm:$0xff]
        %v511 = vld [vmem:[#allocation8 + $0x78] sm:$0xff]
        %v512 = vld [vmem:[#allocation8 + $0x80] sm:$0xff]
        %v513 = vld [vmem:[#allocation8 + $0x88] sm:$0xff]
        %v514 = vld [vmem:[#allocation8 + $0x90] sm:$0xff]
        %v515 = vld [vmem:[#allocation8 + $0x98] sm:$0xff]
        %v516 = vld [vmem:[#allocation8 + $0xa0] sm:$0xff]
        %v517 = vld [vmem:[#allocation8 + $0xa8] sm:$0xff]
        %v518 = vld [vmem:[#allocation8 + $0xb0] sm:$0xff]
        %v519 = vld [vmem:[#allocation8 + $0xb8] sm:$0xff]
        %v520 = vld [vmem:[#allocation8 + $0xc0] sm:$0xff]
        %v521 = vld [vmem:[#allocation8 + $0xc8] sm:$0xff]
        %v522 = vld [vmem:[#allocation8 + $0xd0] sm:$0xff]
        %v523 = vld [vmem:[#allocation8 + $0xd8] sm:$0xff]
        %v524 = vld [vmem:[#allocation8 + $0xe0] sm:$0xff]
        %v525 = vld [vmem:[#allocation8 + $0xe8] sm:$0xff]
        %v526 = vld [vmem:[#allocation8 + $0xf0] sm:$0xff]
        %v527 = vld [vmem:[#allocation8 + $0xf8] sm:$0xff]
        %528 = vmatprep.subr.mxu0 %v527
        %529 = vmatpush1.msra.mxu0 %v526
        %530 = vmatprep.subr.mxu0 %v525
        %531 = vmatpush1.msra.mxu0 %v524
        %532 = vmatprep.subr.mxu0 %v523
        %533 = vmatpush1.msra.mxu0 %v522
        %534 = vmatprep.subr.mxu0 %v521
        %535 = vmatpush1.msra.mxu0 %v520
        %536 = vmatprep.subr.mxu0 %v519
        %537 = vmatpush1.msra.mxu0 %v518
        %538 = vmatprep.subr.mxu0 %v517
        %539 = vmatpush1.msra.mxu0 %v516
        %540 = vmatprep.subr.mxu0 %v515
        %541 = vmatpush1.msra.mxu0 %v514
        %542 = vmatprep.subr.mxu0 %v513
        %543 = vmatpush1.msra.mxu0 %v512
        %544 = vmatprep.subr.mxu0 %v511
        %545 = vmatpush1.msra.mxu0 %v510
        %546 = vmatprep.subr.mxu0 %v509
        %547 = vmatpush1.msra.mxu0 %v508
        %548 = vmatprep.subr.mxu0 %v507
        %549 = vmatpush1.msra.mxu0 %v506
        %550 = vmatprep.subr.mxu0 %v505
        %551 = vmatpush1.msra.mxu0 %v504
        %552 = vmatprep.subr.mxu0 %v503
        %553 = vmatpush1.msra.mxu0 %v502
        %554 = vmatprep.subr.mxu0 %v501
        %555 = vmatpush1.msra.mxu0 %v500
        %556 = vmatprep.subr.mxu0 %v499
        %557 = vmatpush1.msra.mxu0 %v498
        %558 = vmatprep.subr.mxu0 %v497
        %559 = vmatpush1.msra.mxu0 %v496
        %560 = vmatprep.subr.mxu0 0.0
        %561 = vmatpush2.msra.mxu0 0.0
        %562 = vmatprep.subr.mxu0 0.0
        %563 = vmatpush2.msra.mxu0 0.0
        %564 = vmatprep.subr.mxu0 0.0
        %565 = vmatpush2.msra.mxu0 0.0
        %566 = vmatprep.subr.mxu0 0.0
        %567 = vmatpush2.msra.mxu0 0.0
        %568 = vmatprep.subr.mxu0 0.0
        %569 = vmatpush2.msra.mxu0 0.0
        %570 = vmatprep.subr.mxu0 0.0
        %571 = vmatpush2.msra.mxu0 0.0
        %572 = vmatprep.subr.mxu0 0.0
        %573 = vmatpush2.msra.mxu0 0.0
        %574 = vmatprep.subr.mxu0 0.0
        %575 = vmatpush2.msra.mxu0 0.0
        %576 = vmatprep.subr.mxu0 0.0
        %577 = vmatpush2.msra.mxu0 0.0
        %578 = vmatprep.subr.mxu0 0.0
        %579 = vmatpush2.msra.mxu0 0.0
        %580 = vmatprep.subr.mxu0 0.0
        %581 = vmatpush2.msra.mxu0 0.0
        %582 = vmatprep.subr.mxu0 0.0
        %583 = vmatpush2.msra.mxu0 0.0
        %584 = vmatprep.subr.mxu0 0.0
        %585 = vmatpush2.msra.mxu0 0.0
        %586 = vmatprep.subr.mxu0 0.0
        %587 = vmatpush2.msra.mxu0 0.0
        %588 = vmatprep.subr.mxu0 0.0
        %589 = vmatpush2.msra.mxu0 0.0
        %590 = vmatprep.subr.mxu0 0.0
        %591 = vmatpush2.msra.mxu0 0.0
        %592 = vmatprep.mubr.f32.mxu0 0.0
        %593 = vmatmul.mubr.f32.gmra.mxu0 %v343
        %v594 = vpop.f32.mrf.mxu0
        %v595 = vadd.f32 0.0, %v594
        %v596 = vpop.f32.mrf.mxu0
        %v597 = vadd.f32 0.0, %v596
        %598 = vmatprep.mubr.f32.mxu0 0.0
        %599 = vmatmul.mubr.f32.gmra.mxu0 %v344
        %v600 = vpop.f32.mrf.mxu0
        %v601 = vadd.f32 0.0, %v600
        %v602 = vpop.f32.mrf.mxu0
        %v603 = vadd.f32 0.0, %v602
        %604 = vmatprep.mubr.f32.mxu0 0.0
        %605 = vmatmul.mubr.f32.gmra.mxu0 %v345
        %v606 = vpop.f32.mrf.mxu0
        %v607 = vadd.f32 0.0, %v606
        %v608 = vpop.f32.mrf.mxu0
        %v609 = vadd.f32 0.0, %v608
        %610 = vmatprep.mubr.f32.mxu0 0.0
        %611 = vmatmul.mubr.f32.gmra.mxu0 %v346
        %v612 = vpop.f32.mrf.mxu0
        %v613 = vadd.f32 0.0, %v612
        %v614 = vpop.f32.mrf.mxu0
        %v615 = vadd.f32 0.0, %v614
        %616 = vmatprep.mubr.f32.mxu0 0.0
        %617 = vmatmul.mubr.f32.gmra.mxu0 %v347
        %v618 = vpop.f32.mrf.mxu0
        %v619 = vadd.f32 0.0, %v618
        %v620 = vpop.f32.mrf.mxu0
        %v621 = vadd.f32 0.0, %v620
        %622 = vmatprep.mubr.f32.mxu0 0.0
        %623 = vmatmul.mubr.f32.gmra.mxu0 %v348
        %v624 = vpop.f32.mrf.mxu0
        %v625 = vadd.f32 0.0, %v624
        %v626 = vpop.f32.mrf.mxu0
        %v627 = vadd.f32 0.0, %v626
        %628 = vmatprep.mubr.f32.mxu0 0.0
        %629 = vmatmul.mubr.f32.gmra.mxu0 %v349
        %v630 = vpop.f32.mrf.mxu0
        %v631 = vadd.f32 0.0, %v630
        %v632 = vpop.f32.mrf.mxu0
        %v633 = vadd.f32 0.0, %v632
        %634 = vmatprep.mubr.f32.mxu0 0.0
        %635 = vmatmul.mubr.f32.gmra.mxu0 %v350
        %v636 = vpop.f32.mrf.mxu0
        %v637 = vadd.f32 0.0, %v636
        %v638 = vpop.f32.mrf.mxu0
        %v639 = vadd.f32 0.0, %v638
        %640 = vdwg.mxu0
        %v641 = vmul.f32 %v450, %v595
        %v642 = vmul.f32 %v456, %v601
        %v643 = vmul.f32 %v462, %v607
        %v644 = vmul.f32 %v468, %v613
        %v645 = vmul.f32 %v474, %v619
        %v646 = vmul.f32 %v480, %v625
        %v647 = vmul.f32 %v486, %v631
        %v648 = vmul.f32 %v492, %v637
        %v649 = vmul.f32 %v452, %v597
        %v650 = vmul.f32 %v458, %v603
        %v651 = vmul.f32 %v464, %v609
        %v652 = vmul.f32 %v470, %v615
        %v653 = vmul.f32 %v476, %v621
        %v654 = vmul.f32 %v482, %v627
        %v655 = vmul.f32 %v488, %v633
        %v656 = vmul.f32 %v494, %v639
        %v657 = vsub.f32 %v641, %v649
        %v658 = vsub.f32 %v642, %v650
        %v659 = vsub.f32 %v643, %v651
        %v660 = vsub.f32 %v644, %v652
        %v661 = vsub.f32 %v645, %v653
        %v662 = vsub.f32 %v646, %v654
        %v663 = vsub.f32 %v647, %v655
        %v664 = vsub.f32 %v648, %v656
        %v665 = vmul.f32 %v450, %v597
        %v666 = vmul.f32 %v456, %v603
        %v667 = vmul.f32 %v462, %v609
        %v668 = vmul.f32 %v468, %v615
        %v669 = vmul.f32 %v474, %v621
        %v670 = vmul.f32 %v480, %v627
        %v671 = vmul.f32 %v486, %v633
        %v672 = vmul.f32 %v492, %v639
        %v673 = vmul.f32 %v452, %v595
        %v674 = vmul.f32 %v458, %v601
        %v675 = vmul.f32 %v464, %v607
        %v676 = vmul.f32 %v470, %v613
        %v677 = vmul.f32 %v476, %v619
        %v678 = vmul.f32 %v482, %v625
        %v679 = vmul.f32 %v488, %v631
        %v680 = vmul.f32 %v494, %v637
        %v681 = vadd.f32 %v665, %v673
        %v682 = vadd.f32 %v666, %v674
        %v683 = vadd.f32 %v667, %v675
        %v684 = vadd.f32 %v668, %v676
        %v685 = vadd.f32 %v669, %v677
        %v686 = vadd.f32 %v670, %v678
        %v687 = vadd.f32 %v671, %v679
        %v688 = vadd.f32 %v672, %v680
        %v689 = vadd.f32 %v657, %v658
        %v690 = vadd.f32 %v689, %v659
        %v691 = vadd.f32 %v690, %v660
        %v692 = vadd.f32 %v691, %v661
        %v693 = vadd.f32 %v692, %v662
        %v694 = vadd.f32 %v693, %v663
        %v695 = vadd.f32 %v694, %v664
        %v696 = vrot.slane %v695, 4
        %v697 = vadd.f32 %v695, %v696
        %v698 = vrot.slane %v697, 2
        %v699 = vadd.f32 %v697, %v698
        %v700 = vrot.slane %v699, 1
        %v701 = vadd.f32 %v699, %v700
        %v702 = vadd.f32 %v681, %v682
        %v703 = vadd.f32 %v702, %v683
        %v704 = vadd.f32 %v703, %v684
        %v705 = vadd.f32 %v704, %v685
        %v706 = vadd.f32 %v705, %v686
        %v707 = vadd.f32 %v706, %v687
        %v708 = vadd.f32 %v707, %v688
        %v709 = vrot.slane %v708, 4
        %v710 = vadd.f32 %v708, %v709
        %v711 = vrot.slane %v710, 2
        %v712 = vadd.f32 %v710, %v711
        %v713 = vrot.slane %v712, 1
        %v714 = vadd.f32 %v712, %v713
        %p715 = scmp.eq.s32.totalorder %s32, 0
        // Predicated region
        $region53: #{tpu_custom_call.1} parent=35 // pred_check
          %p716 = pneg %p715
        $region54: #{tpu_custom_call.1} parent=35 // pred_check_branch
          %718 = sbr.rel (%p716) target = $region56
        $region55: #{tpu_custom_call.1} parent=35 // pred_region
          %v719 = vlaneseq
          %vm720 = vcmp.ge.s32.totalorder %v719, 0
          %vm721 = vcmp.lt.s32.totalorder %v719, 256
          %vm722 = vmand %vm720, %vm721
          %723 = vst.msk [vmem:[%s329] sm:$0x3] %vm722, 0.0
        $region56: #{tpu_custom_call.1} parent=35 // pred_fallthru
          _
        %v724 = vld [vmem:[%s329] sm:$0x3]
        %v727 = vcombine.low %v701, %v714
        %v729 = vunpack.c.l.s4 1966171168
        %v730 = vunpack.c.0.s8 %v729
        %v731 = vlaneseq
        %v732 = vshrl.u32 %v731, 7
        %v733 = vsub.s32 %v730, %v732
        %v734 = vrot.slane %v727, %v733
        %v736 = vunpack.c.l.s4 1966171168
        %v737 = vunpack.c.0.s8 %v736
        %v738 = vlaneseq
        %v739 = vshrl.u32 %v738, 7
        %v740 = vsub.s32 %v737, %v739
        %v741 = vrot.slane %v734, %v740
        %v743 = vadd.f32 %v724, %v741
        %v744 = vlaneseq
        %vm745 = vcmp.ge.s32.totalorder %v744, 0
        %vm746 = vcmp.lt.s32.totalorder %v744, 256
        %vm747 = vmand %vm745, %vm746
        %748 = vst.msk [vmem:[%s329] sm:$0x3] %vm747, %v743
        %s749 = sand.u32 %s162, 1
        %s750 = scalar_lea.sflag [#allocation4], %s749
        %s751 = sand.u32 %s162, 1
        %s752 = smul.addr %s751, 2
        %s753 = scalar_lea.vmem [#allocation10], %s752
        // Predicated region
        $region57: #{tpu_custom_call.1} parent=35 // pred_check
          %p754 = pneg %p172
        $region58: #{tpu_custom_call.1} parent=35 // pred_check_branch
          %756 = sbr.rel (%p754) target = $region60
        $region59: #{tpu_custom_call.1} parent=35 // pred_region
          %s757 = smul.u32 2, %s31
          %s759 = ssub.s32 32, 32
          %760 = vsyncadd %s750, %s759
          %s761 = smul.addr %s30, 2
          %s762 = sadd.s32 %s757, %s761
          %s763 = smul.addr %s762, 16
          %s764 = scalar_lea.hbm %s4, %s763
          %s766 = sshll.u32 %s753, 4
          %s767 = int_to_ptr.vmem [resolvable:$true] %s766
          %769 = dma.vmem_to_hbm [thread:$0]  %s767, 32, %s764, %s750
        $region60: #{tpu_custom_call.1} parent=35 // pred_fallthru
          _
      $region36: #{tpu_custom_call.1} parent=5 // pred_fallthru
        _
      %p770 = scmp.le.s32.totalorder 2, %s20
      // Predicated region
      $region61: #{tpu_custom_call.1} parent=5 // pred_check
        %p771 = pneg %p770
      $region62: #{tpu_custom_call.1} parent=5 // pred_check_branch
        %773 = sbr.rel (%p771) target = $region64
      $region63: #{tpu_custom_call.1} parent=5 // pred_region
        %s774 = ssub.s32 %s20, 2
        // Predicated region
        $region65: #{tpu_custom_call.1} parent=63 // pred_check
          %p775 = pneg %p178
        $region66: #{tpu_custom_call.1} parent=63 // pred_check_branch
          %777 = sbr.rel (%p775) target = $region68
        $region67: #{tpu_custom_call.1} parent=63 // pred_region
          %s778 = sand.u32 %s163, 1
          %s779 = scalar_lea.sflag [#allocation4], %s778
          %s780 = sand.u32 %s163, 1
          %s781 = smul.addr %s780, 2
          %s782 = scalar_lea.vmem [#allocation10], %s781
          %783 = dma.done %s779, 32
        $region68: #{tpu_custom_call.1} parent=63 // pred_fallthru
          _
      $region64: #{tpu_custom_call.1} parent=5 // pred_fallthru
        _
    $region6: #{tpu_custom_call.1} parent=1 // loop_footer
      %s24 = sadd.s32 1, %s20
    $region7: #{tpu_custom_call.1} parent=1 // loop_footer_branch
      %19 = sbr.rel target = $region3
    $region8: #{tpu_custom_call.1} parent=1 // loop_exit
      _
    %784 = vsyncpa [#allocation3], 1
    %s785 = scalar_lea.sflag [#allocation3], 1
    %786 = vsyncpa %s785, 1
    %787 = vsyncpa [#allocation6], 1
    %s788 = scalar_lea.sflag [#allocation6], 1
    %789 = vsyncpa %s788, 1
    %790 = vsyncpa [#allocation9], 1
    %791 = vsyncpa [#allocation4], 1
    %s792 = scalar_lea.sflag [#allocation4], 1
    %793 = vsyncpa %s792, 1

</llo_original>
